<compile_context>
chip_gen: v7x
topology: tpu7x:2x2x1
jax: 0.10.0
libtpu: 0.0.40
codegen_flags: <defaults>
</compile_context>

<pallas_src>
import functools
import math

import jax
import jax.numpy as jnp
from jax.experimental import pallas as pl
from jax.experimental.pallas import tpu as pltpu


def _round_up(x: int, m: int) -> int:
    return ((x + m - 1) // m) * m


def _ffn_kernel_inplace(x_ref, w1_ref, b1_ref, w2_ref, b2_ref, o_ref, *, silu_dtype):
    """f32-output variant: the (tm, D) output block is resident across the d_ff
    grid axis, so accumulate directly into it (saves a tm*D*4 B scratch)."""
    j = pl.program_id(1)

    @pl.when(j == 0)
    def _():
        # Seed accumulator with the fc2 bias -> no epilogue add.
        o_ref[...] = jnp.broadcast_to(b2_ref[...].astype(o_ref.dtype), o_ref.shape)

    h = jnp.dot(x_ref[...], w1_ref[...], preferred_element_type=jnp.float32)
    h = h + b1_ref[...].astype(jnp.float32)          # (1, tf) broadcasts over rows
    h = h.astype(silu_dtype)
    h = h * jax.nn.sigmoid(h)                        # SiLU (EUP exp)
    o_ref[...] += jnp.dot(h.astype(w2_ref.dtype), w2_ref[...],
                          preferred_element_type=jnp.float32)


def _ffn_kernel_scratch(x_ref, w1_ref, b1_ref, w2_ref, b2_ref, o_ref, acc_ref, *, silu_dtype):
    """Generic variant (e.g. bf16 output): f32 scratch accumulator."""
    j = pl.program_id(1)

    @pl.when(j == 0)
    def _():
        acc_ref[...] = jnp.broadcast_to(b2_ref[...].astype(jnp.float32), acc_ref.shape)

    h = jnp.dot(x_ref[...], w1_ref[...], preferred_element_type=jnp.float32)
    h = h + b1_ref[...].astype(jnp.float32)
    h = h.astype(silu_dtype)
    h = h * jax.nn.sigmoid(h)
    acc_ref[...] += jnp.dot(h.astype(w2_ref.dtype), w2_ref[...],
                            preferred_element_type=jnp.float32)

    @pl.when(j == pl.num_programs(1) - 1)
    def _():
        o_ref[...] = acc_ref[...].astype(o_ref.dtype)


def _chip_config():
    """Per-generation tile / VMEM defaults (weight-streaming roofline)."""
    kind = ""
    try:
        kind = jax.devices()[0].device_kind.lower()
    except Exception:
        pass
    if "v7" in kind or "tpu7" in kind:
        # 64 MiB VMEM, 2 TCs/chip: smaller tiles, and >=2 M-tiles for megacore.
        return dict(tm=512, tf=256, vmem_bytes=52 * 1024 * 1024,
                    min_m_tiles=2, bf16_vpu=True)
    if "v6" in kind:
        # 128 MiB VMEM: large tm lifts FLOP/byte on the streamed weights.
        return dict(tm=1024, tf=256, vmem_bytes=100 * 1024 * 1024,
                    min_m_tiles=1, bf16_vpu=True)
    if "v5 lit" in kind or "v5e" in kind or "v5lite" in kind:
        # v5e is near roofline balance already at tm=256; no bf16 VPU/EUP.
        return dict(tm=256, tf=512, vmem_bytes=100 * 1024 * 1024,
                    min_m_tiles=1, bf16_vpu=False)
    # Unknown generation (v4/v5p/interpret): conservative middle ground.
    return dict(tm=512, tf=256, vmem_bytes=64 * 1024 * 1024,
                min_m_tiles=1, bf16_vpu=True)


def feed_forward(x, w1, b1, w2, b2, *, tm=None, tf=None,
                 vmem_limit_bytes=None, compute_dtype=None):
    """x: (B, S, d_model); w1: (d_model, d_ff); b1: (d_ff,);
    w2: (d_ff, d_model); b2: (d_model,).

    compute_dtype: optionally cast x/W1/W2 (e.g. jnp.bfloat16) for MXU
    throughput mode on v6e/v7x; default keeps the caller's dtypes.
    """
    B, S, D = x.shape
    F = w1.shape[1]
    M = B * S

    cfg = _chip_config()
    tm = cfg["tm"] if tm is None else tm
    tf = cfg["tf"] if tf is None else tf
    vmem_limit_bytes = cfg["vmem_bytes"] if vmem_limit_bytes is None else vmem_limit_bytes

    if compute_dtype is not None:
        x = x.astype(compute_dtype)
        w1 = w1.astype(compute_dtype)
        w2 = w2.astype(compute_dtype)
    out_dtype = x.dtype

    # ---- tile sizing -------------------------------------------------------
    tm = max(8, min(tm, _round_up(M, 8)))          # sublane-aligned row tile
    tf = max(128, min(tf, _round_up(F, 128)))      # lane-aligned d_ff tile

    # v7x: guarantee >= min_m_tiles so the "parallel" M axis feeds both TCs.
    while _round_up(M, tm) // tm < cfg["min_m_tiles"] and tm > 8:
        tm = max(8, _round_up(tm // 2, 8))

    # VMEM budget check (double-buffered inputs/outputs + optional scratch).
    def _vmem_estimate(tm_, tf_):
        xsz = jnp.dtype(x.dtype).itemsize
        wsz = jnp.dtype(w1.dtype).itemsize
        osz = jnp.dtype(out_dtype).itemsize
        total = 2 * tm_ * D * xsz            # x tiles
        total += 2 * D * tf_ * wsz           # W1 tiles
        total += 2 * 8 * tf_ * wsz           # b1 tiles (sublane-padded)
        total += 2 * tf_ * D * wsz           # W2 tiles
        total += 2 * 8 * D * osz             # b2 (resident)
        total += 2 * tm_ * D * osz           # output tiles
        if out_dtype != jnp.float32:
            total += tm_ * D * 4             # f32 scratch accumulator
        return total

    while _vmem_estimate(tm, tf) > 0.8 * vmem_limit_bytes and (tm > 8 or tf > 128):
        if tm > 8:
            tm = max(8, _round_up(tm // 2, 8))
        else:
            tf = max(128, tf // 2)

    M_pad = _round_up(M, tm)
    F_pad = _round_up(F, tf)

    # ---- zero-pad ragged shapes (exact: silu(0)=0 -> padded d_ff adds 0) ----
    x2 = x.reshape(M, D)
    if M_pad != M:
        x2 = jnp.pad(x2, ((0, M_pad - M), (0, 0)))
    w1p, b1p, w2p = w1, b1, w2
    if F_pad != F:
        w1p = jnp.pad(w1, ((0, 0), (0, F_pad - F)))
        b1p = jnp.pad(b1, (0, F_pad - F))
        w2p = jnp.pad(w2, ((0, F_pad - F), (0, 0)))
    b1_2 = b1p.reshape(1, F_pad)
    b2_2 = b2.reshape(1, D)

    grid = (M_pad // tm, F_pad // tf)

    # SiLU in bf16 only when weights are bf16 and the chip has bf16 VPU/EUP.
    silu_dtype = (jnp.bfloat16
                  if (w2p.dtype == jnp.bfloat16 and cfg["bf16_vpu"])
                  else jnp.float32)

    if out_dtype == jnp.float32:
        kernel = functools.partial(_ffn_kernel_inplace, silu_dtype=silu_dtype)
        scratch_shapes = []
    else:
        kernel = functools.partial(_ffn_kernel_scratch, silu_dtype=silu_dtype)
        scratch_shapes = [pltpu.VMEM((tm, D), jnp.float32)]

    # TODO(synk): for tiny d_model (< 128 lanes) fold heads/batch into the lane
    # axis to avoid masked vst.msk partial stores on the output.
    out = pl.pallas_call(
        kernel,
        out_shape=jax.ShapeDtypeStruct((M_pad, D), out_dtype),
        grid_spec=pltpu.PrefetchScalarGridSpec(
            num_scalar_prefetch=0,
            grid=grid,
            in_specs=[
                pl.BlockSpec((tm, D), lambda i, j: (i, 0)),   # x rows
                pl.BlockSpec((D, tf), lambda i, j: (0, j)),   # W1 column tile
                pl.BlockSpec((1, tf), lambda i, j: (0, j)),   # b1 tile
                pl.BlockSpec((tf, D), lambda i, j: (j, 0)),   # W2 row tile
                pl.BlockSpec((1, D), lambda i, j: (0, 0)),    # b2 (resident)
            ],
            out_specs=pl.BlockSpec((tm, D), lambda i, j: (i, 0)),
            scratch_shapes=scratch_shapes,
        ),
        compiler_params=pltpu.CompilerParams(
            # M-tiles independent (megacore on v7x); d_ff axis is the reduction.
            dimension_semantics=("parallel", "arbitrary"),
            vmem_limit_bytes=int(vmem_limit_bytes),
        ),
    )(x2, w1p, b1_2, w2p, b2_2)

    if M_pad != M:
        out = out[:M]
    return out.reshape(B, S, D)


if __name__ == "__main__":
    # Small shapes consistent with the module: batch=2, seq=8, d_model=32, d_ff=64.
    batch, seq, d_model, d_ff = 2, 8, 32, 64

    key = jax.random.PRNGKey(0)
    kx, k1, k2, k3, k4 = jax.random.split(key, 5)

    x = jax.random.normal(kx, (batch, seq, d_model), dtype=jnp.float32)

    # nn.Linear-style init: U(-1/sqrt(fan_in), 1/sqrt(fan_in)).
    lim1 = 1.0 / math.sqrt(d_model)
    w1 = jax.random.uniform(k1, (d_model, d_ff), minval=-lim1, maxval=lim1, dtype=jnp.float32)
    b1 = jax.random.uniform(k2, (d_ff,), minval=-lim1, maxval=lim1, dtype=jnp.float32)
    lim2 = 1.0 / math.sqrt(d_ff)
    w2 = jax.random.uniform(k3, (d_ff, d_model), minval=-lim2, maxval=lim2, dtype=jnp.float32)
    b2 = jax.random.uniform(k4, (d_model,), minval=-lim2, maxval=lim2, dtype=jnp.float32)

    y = feed_forward(x, w1, b1, w2, b2)
    y = jax.block_until_ready(y)

    # Pure-JAX reference: fc2(silu(fc1(x)))  (dropout is declared but unused).
    h = x @ w1 + b1
    ref = (h * jax.nn.sigmoid(h)) @ w2 + b2
    assert y.shape == (batch, seq, d_model)
    assert jnp.allclose(y, ref, atol=1e-4, rtol=1e-4), "FeedForward kernel mismatch"

    print("KERNEL_OK")
</pallas_src>

<mosaic_0001>
module attributes {stable_mosaic.version = 11 : i64} {
  func.func @_ffn_kernel_inplace(%arg0: i32, %arg1: i32, %arg2: memref<16x32xf32, #tpu.memory_space<vmem>>, %arg3: memref<32x128xf32, #tpu.memory_space<vmem>>, %arg4: memref<1x128xf32, #tpu.memory_space<vmem>>, %arg5: memref<128x32xf32, #tpu.memory_space<vmem>>, %arg6: memref<1x32xf32, #tpu.memory_space<vmem>>, %arg7: memref<16x32xf32, #tpu.memory_space<vmem>>) attributes {dimension_semantics = [#tpu.dimension_semantics<parallel>, #tpu.dimension_semantics<arbitrary>], iteration_bounds = array<i64: 1, 1>, scalar_prefetch = 0 : i64, scratch_operands = 0 : i64, tpu.core_type = #tpu.core_type<tc>, window_params = [{transform_indices = @transform_0, window_bounds = array<i64: 16, 32>}, {transform_indices = @transform_1, window_bounds = array<i64: 32, 128>}, {transform_indices = @transform_2, window_bounds = array<i64: 1, 128>}, {transform_indices = @transform_3, window_bounds = array<i64: 128, 32>}, {pipeline_mode = #tpu.pipeline_mode<synchronous>, transform_indices = @transform_4, window_bounds = array<i64: 1, 32>}, {transform_indices = @transform_5, window_bounds = array<i64: 16, 32>}]} {
    %c0_i32 = arith.constant 0 : i32
    %0 = arith.cmpi eq, %arg1, %c0_i32 : i32
    %1 = arith.extui %0 : i1 to i32
    %c0_i32_0 = arith.constant 0 : i32
    %2 = arith.cmpi ne, %1, %c0_i32_0 : i32
    scf.if %2 {
      %c0_14 = arith.constant 0 : index
      %c0_15 = arith.constant 0 : index
      %20 = vector.load %arg6[%c0_14, %c0_15] : memref<1x32xf32, #tpu.memory_space<vmem>>, vector<1x32xf32>
      %21 = vector.shape_cast %20 : vector<1x32xf32> to vector<1x32xf32>
      %22 = vector.broadcast %21 : vector<1x32xf32> to vector<16x32xf32>
      %c0_16 = arith.constant 0 : index
      %c0_17 = arith.constant 0 : index
      %23 = vector.load %arg7[%c0_16, %c0_17] : memref<16x32xf32, #tpu.memory_space<vmem>>, vector<16x32xf32>
      tpu.vector_store %arg7[%c0_16, %c0_17], %22 {strides = array<i32>} : memref<16x32xf32, #tpu.memory_space<vmem>>, vector<16x32xf32>,
    } else {
    }
    %c0 = arith.constant 0 : index
    %c0_1 = arith.constant 0 : index
    %3 = vector.load %arg2[%c0, %c0_1] : memref<16x32xf32, #tpu.memory_space<vmem>>, vector<16x32xf32>
    %c0_2 = arith.constant 0 : index
    %c0_3 = arith.constant 0 : index
    %4 = vector.load %arg3[%c0_2, %c0_3] : memref<32x128xf32, #tpu.memory_space<vmem>>, vector<32x128xf32>
    %cst = arith.constant dense<0.000000e+00> : vector<16x128xf32>
    %5 = tpu.matmul %3, %4, %cst {dimension_numbers = #tpu.dot_dimension_numbers<[1], [0], [0], [1], [0, 0, 1, 1], [], []>} : vector<16x32xf32>, vector<32x128xf32>, vector<16x128xf32> -> vector<16x128xf32>
    %c0_4 = arith.constant 0 : index
    %c0_5 = arith.constant 0 : index
    %6 = vector.load %arg4[%c0_4, %c0_5] : memref<1x128xf32, #tpu.memory_space<vmem>>, vector<1x128xf32>
    %7 = vector.broadcast %6 : vector<1x128xf32> to vector<16x128xf32>
    %8 = arith.addf %5, %7 : vector<16x128xf32>
    %9 = arith.negf %8 : vector<16x128xf32>
    %10 = math.exp %9 : vector<16x128xf32>
    %cst_6 = arith.constant 1.000000e+00 : f32
    %11 = vector.broadcast %cst_6 : f32 to vector<16x128xf32>
    %12 = arith.addf %11, %10 : vector<16x128xf32>
    %13 = arith.divf %11, %12 : vector<16x128xf32>
    %14 = arith.mulf %8, %13 : vector<16x128xf32>
    %c0_7 = arith.constant 0 : index
    %c0_8 = arith.constant 0 : index
    %15 = vector.load %arg7[%c0_7, %c0_8] : memref<16x32xf32, #tpu.memory_space<vmem>>, vector<16x32xf32>
    %c0_9 = arith.constant 0 : index
    %c0_10 = arith.constant 0 : index
    %16 = vector.load %arg5[%c0_9, %c0_10] : memref<128x32xf32, #tpu.memory_space<vmem>>, vector<128x32xf32>
    %cst_11 = arith.constant dense<0.000000e+00> : vector<16x32xf32>
    %17 = tpu.matmul %14, %16, %cst_11 {dimension_numbers = #tpu.dot_dimension_numbers<[1], [0], [0], [1], [0, 0, 1, 1], [], []>} : vector<16x128xf32>, vector<128x32xf32>, vector<16x32xf32> -> vector<16x32xf32>
    %18 = arith.addf %15, %17 : vector<16x32xf32>
    %c0_12 = arith.constant 0 : index
    %c0_13 = arith.constant 0 : index
    %19 = vector.load %arg7[%c0_12, %c0_13] : memref<16x32xf32, #tpu.memory_space<vmem>>, vector<16x32xf32>
    tpu.vector_store %arg7[%c0_12, %c0_13], %18 {strides = array<i32>} : memref<16x32xf32, #tpu.memory_space<vmem>>, vector<16x32xf32>,
    return
  }
  func.func @transform_0(%arg0: i32, %arg1: i32) -> (i32, i32) {
    %c0_i32 = arith.constant 0 : i32
    %c0_i32_0 = arith.constant 0 : i32
    return %arg0, %c0_i32 : i32, i32
  }
  func.func @transform_1(%arg0: i32, %arg1: i32) -> (i32, i32) {
    %c0_i32 = arith.constant 0 : i32
    %c0_i32_0 = arith.constant 0 : i32
    return %c0_i32, %arg1 : i32, i32
  }
  func.func @transform_2(%arg0: i32, %arg1: i32) -> (i32, i32) {
    %c0_i32 = arith.constant 0 : i32
    %c0_i32_0 = arith.constant 0 : i32
    return %c0_i32, %arg1 : i32, i32
  }
  func.func @transform_3(%arg0: i32, %arg1: i32) -> (i32, i32) {
    %c0_i32 = arith.constant 0 : i32
    %c0_i32_0 = arith.constant 0 : i32
    return %arg1, %c0_i32 : i32, i32
  }
  func.func @transform_4(%arg0: i32, %arg1: i32) -> (i32, i32) {
    %c0_i32 = arith.constant 0 : i32
    %c0_i32_0 = arith.constant 0 : i32
    %c0_i32_1 = arith.constant 0 : i32
    return %c0_i32, %c0_i32_0 : i32, i32
  }
  func.func @transform_5(%arg0: i32, %arg1: i32) -> (i32, i32) {
    %c0_i32 = arith.constant 0 : i32
    %c0_i32_0 = arith.constant 0 : i32
    return %arg0, %c0_i32 : i32, i32
  }
}

</mosaic_0001>

<llo_original>
// kernel: tpu_custom_call.1
$region0: #{tpu_custom_call.1}
  #allocation0 [shape = 'u32[]', space=smem, size = 0x4, offset = 0x4, fixed_abs, tag = 'smem constant byte address 0x4 - core index']
  #allocation1 [shape = 'u32[144,128]{1,0:T(1,128)}', space=vmem, size = 0x12000, scoped, tag = 'internal scratch']
  %s0 = inlined_call_operand.hbm [shape: f32[16,32], index: 0, kind: input, shape index: {}]
  %s1 = inlined_call_operand.hbm [shape: f32[32,128], index: 1, kind: input, shape index: {}]
  %s2 = inlined_call_operand.hbm [shape: f32[1,128], index: 2, kind: input, shape index: {}]
  %s3 = inlined_call_operand.hbm [shape: f32[128,32], index: 3, kind: input, shape index: {}]
  %s4 = inlined_call_operand.hbm [shape: f32[1,32], index: 4, kind: input, shape index: {}]
  %s5 = inlined_call_operand.hbm [shape: f32[16,32], index: 5, kind: output, shape index: {}]
  %s6 = sld [smem:[#allocation0]]
  $region54: #{tpu_custom_call.1} parent=0
    _
  %s8 = ssub.s32 1, %s6
  %s9 = scalar_select 0, %s8, %s6
  $region1: #{tpu_custom_call.1} parent=0
    #allocation2 [shape = 'u8[8192]{0}', space=vmem, size = 0x2000, scoped, tag = 'input window, operand 0, single buffered']
    #allocation3 [shape = 's32[1]{0}', space=sflag, size = 0x4, scoped, tag = 'scoped memory for tpu_custom_call.1']
    #allocation4 [shape = 's32[1]{0}', space=sflag, size = 0x4, scoped, tag = 'scoped memory for tpu_custom_call.1']
    #allocation5 [shape = 'u8[16384]{0}', space=vmem, size = 0x4000, scoped, tag = 'input window, operand 1, single buffered']
    #allocation6 [shape = 's32[1]{0}', space=sflag, size = 0x4, scoped, tag = 'scoped memory for tpu_custom_call.1']
    #allocation7 [shape = 'u8[512]{0}', space=vmem, size = 0x400, scoped, tag = 'input window, operand 2, single buffered']
    #allocation8 [shape = 'u8[65536]{0}', space=vmem, size = 0x10000, scoped, tag = 'input window, operand 3, single buffered']
    #allocation9 [shape = 's32[1]{0}', space=sflag, size = 0x4, scoped, tag = 'scoped memory for tpu_custom_call.1']
    #allocation10 [shape = 'u8[512]{0}', space=vmem, size = 0x400, scoped, tag = 'input window, operand 4, single buffered']
    #allocation11 [shape = 'u8[8192]{0}', space=vmem, size = 0x2000, scoped, tag = 'output window, operand 0, single buffered']
    %10 = vsyncpa [#allocation3], 0
    %11 = vsyncpa [#allocation6], 0
    %12 = vsyncpa [#allocation9], 0
    %13 = vsyncpa [#allocation4], 0
    // Predicated region
    $region2: #{tpu_custom_call.1} parent=1 // pred_check
      _
    $region3: #{tpu_custom_call.1} parent=1 // pred_check_branch
      %15 = sbr.rel (0) target = $region5
    $region4: #{tpu_custom_call.1} parent=1 // pred_region
      %s17 = ssub.s32 256, 256
      %18 = vsyncadd [#allocation3], %s17
      %s19 = sshll.u32 [#allocation2], 4
      %s20 = int_to_ptr.vmem [resolvable:$true] %s19
      %25 = dma.hbm_to_vmem [thread:$0]  %s0, 256, %s20, [#allocation3], 128, 128, 8
    $region5: #{tpu_custom_call.1} parent=1 // pred_fallthru
      _
    // Predicated region
    $region6: #{tpu_custom_call.1} parent=1 // pred_check
      _
    $region7: #{tpu_custom_call.1} parent=1 // pred_check_branch
      %27 = sbr.rel (0) target = $region9
    $region8: #{tpu_custom_call.1} parent=1 // pred_region
      %s29 = ssub.s32 512, 512
      %30 = vsyncadd [#allocation6], %s29
      %s31 = sshll.u32 [#allocation5], 4
      %s32 = int_to_ptr.vmem [resolvable:$true] %s31
      %37 = dma.hbm_to_vmem [thread:$0]  %s1, 512, %s32, [#allocation6], 128, 128, 8
    $region9: #{tpu_custom_call.1} parent=1 // pred_fallthru
      _
    // Predicated region
    $region10: #{tpu_custom_call.1} parent=1 // pred_check
      _
    $region11: #{tpu_custom_call.1} parent=1 // pred_check_branch
      %39 = sbr.rel (0) target = $region13
    $region12: #{tpu_custom_call.1} parent=1 // pred_region
      %s41 = ssub.s32 16, 16
      %42 = vsyncadd [#allocation6], %s41
      %s44 = sshll.u32 [#allocation7], 4
      %s45 = int_to_ptr.vmem [resolvable:$true] %s44
      %47 = dma.hbm_to_vmem [thread:$0]  %s2, 16, %s45, [#allocation6]
    $region13: #{tpu_custom_call.1} parent=1 // pred_fallthru
      _
    // Predicated region
    $region14: #{tpu_custom_call.1} parent=1 // pred_check
      _
    $region15: #{tpu_custom_call.1} parent=1 // pred_check_branch
      %49 = sbr.rel (0) target = $region17
    $region16: #{tpu_custom_call.1} parent=1 // pred_region
      %s51 = ssub.s32 2048, 2048
      %52 = vsyncadd [#allocation9], %s51
      %s53 = sshll.u32 [#allocation8], 4
      %s54 = int_to_ptr.vmem [resolvable:$true] %s53
      %59 = dma.hbm_to_vmem [thread:$0]  %s3, 2048, %s54, [#allocation9], 128, 128, 8
    $region17: #{tpu_custom_call.1} parent=1 // pred_fallthru
      _
    // Predicated region
    $region18: #{tpu_custom_call.1} parent=1 // pred_check
      _
    $region19: #{tpu_custom_call.1} parent=1 // pred_check_branch
      %61 = sbr.rel (0) target = $region21
    $region20: #{tpu_custom_call.1} parent=1 // pred_region
      %s63 = ssub.s32 16, 16
      %64 = vsyncadd [#allocation9], %s63
      %s66 = sshll.u32 [#allocation10], 4
      %s67 = int_to_ptr.vmem [resolvable:$true] %s66
      %69 = dma.hbm_to_vmem [thread:$0]  %s4, 16, %s67, [#allocation9]
    $region21: #{tpu_custom_call.1} parent=1 // pred_fallthru
      _
    // Predicated region
    $region22: #{tpu_custom_call.1} parent=1 // pred_check
      _
    $region23: #{tpu_custom_call.1} parent=1 // pred_check_branch
      %71 = sbr.rel (0) target = $region25
    $region24: #{tpu_custom_call.1} parent=1 // pred_region
      %72 = dma.done [#allocation3], 256
    $region25: #{tpu_custom_call.1} parent=1 // pred_fallthru
      _
    // Predicated region
    $region26: #{tpu_custom_call.1} parent=1 // pred_check
      _
    $region27: #{tpu_custom_call.1} parent=1 // pred_check_branch
      %74 = sbr.rel (0) target = $region29
    $region28: #{tpu_custom_call.1} parent=1 // pred_region
      %75 = dma.done [#allocation6], 512
    $region29: #{tpu_custom_call.1} parent=1 // pred_fallthru
      _
    // Predicated region
    $region30: #{tpu_custom_call.1} parent=1 // pred_check
      _
    $region31: #{tpu_custom_call.1} parent=1 // pred_check_branch
      %77 = sbr.rel (0) target = $region33
    $region32: #{tpu_custom_call.1} parent=1 // pred_region
      %78 = dma.done [#allocation6], 16
    $region33: #{tpu_custom_call.1} parent=1 // pred_fallthru
      _
    // Predicated region
    $region34: #{tpu_custom_call.1} parent=1 // pred_check
      _
    $region35: #{tpu_custom_call.1} parent=1 // pred_check_branch
      %80 = sbr.rel (0) target = $region37
    $region36: #{tpu_custom_call.1} parent=1 // pred_region
      %81 = dma.done [#allocation9], 2048
    $region37: #{tpu_custom_call.1} parent=1 // pred_fallthru
      _
    // Predicated region
    $region38: #{tpu_custom_call.1} parent=1 // pred_check
      _
    $region39: #{tpu_custom_call.1} parent=1 // pred_check_branch
      %83 = sbr.rel (0) target = $region41
    $region40: #{tpu_custom_call.1} parent=1 // pred_region
      %84 = dma.done [#allocation9], 16
    $region41: #{tpu_custom_call.1} parent=1 // pred_fallthru
      _
    %p85 = scmp.eq.s32.totalorder 0, 0
    // Predicated region
    $region42: #{tpu_custom_call.1} parent=1 // pred_check
      %p86 = pneg %p85
    $region43: #{tpu_custom_call.1} parent=1 // pred_check_branch
      %88 = sbr.rel (%p86) target = $region45
    $region44: #{tpu_custom_call.1} parent=1 // pred_region
      %v89 = vld [vmem:[#allocation10] sm:$0x1]
      %v91 = vlaneseq
      %v92 = vshrl.u32 %v91, 7
      %v93 = vsub.s32 0, %v92
      %v94 = vrot.slane %v89, %v93
      %vm96 = vcmask 261120
      %97 = vst.msk [vmem:[#allocation11] sm:$0xff] %vm96, %v94
      %98 = vst.msk [vmem:[#allocation11 + $0x8] sm:$0xff] %vm96, %v94
    $region45: #{tpu_custom_call.1} parent=1 // pred_fallthru
      _
    %v99 = vld [vmem:[#allocation2] sm:$0xff]
    %v100 = vld [vmem:[#allocation2 + $0x8] sm:$0xff]
    %v101 = vld [vmem:[#allocation5] sm:$0xff]
    %v102 = vld [vmem:[#allocation5 + $0x8] sm:$0xff]
    %v103 = vld [vmem:[#allocation5 + $0x10] sm:$0xff]
    %v104 = vld [vmem:[#allocation5 + $0x18] sm:$0xff]
    %v105 = vld [vmem:[#allocation7] sm:$0x1]
    %v107 = vlaneseq
    %v108 = vshrl.u32 %v107, 7
    %v109 = vsub.s32 0, %v108
    %v110 = vrot.slane %v105, %v109
    %vm112 = vcmask 261120
    %v114 = vsel %vm112, %v99, 0
    %v117 = vsel %vm112, %v100, 0
    %119 = vmatprep.subr.mxu0 0.0
    %120 = vmatpush1.msra.mxu0 %v101
    %121 = vmatprep.subr.mxu0 0.0
    %122 = vmatpush1.msra.mxu0 %v102
    %123 = vmatprep.subr.mxu0 0.0
    %124 = vmatpush1.msra.mxu0 %v103
    %125 = vmatprep.subr.mxu0 0.0
    %126 = vmatpush1.msra.mxu0 %v104
    %127 = vmatprep.subr.mxu0 0.0
    %128 = vmatpush1.msra.mxu0 0.0
    %129 = vmatprep.subr.mxu0 0.0
    %130 = vmatpush1.msra.mxu0 0.0
    %131 = vmatprep.subr.mxu0 0.0
    %132 = vmatpush1.msra.mxu0 0.0
    %133 = vmatprep.subr.mxu0 0.0
    %134 = vmatpush1.msra.mxu0 0.0
    %135 = vmatprep.subr.mxu0 0.0
    %136 = vmatpush1.msra.mxu0 0.0
    %137 = vmatprep.subr.mxu0 0.0
    %138 = vmatpush1.msra.mxu0 0.0
    %139 = vmatprep.subr.mxu0 0.0
    %140 = vmatpush1.msra.mxu0 0.0
    %141 = vmatprep.subr.mxu0 0.0
    %142 = vmatpush1.msra.mxu0 0.0
    %143 = vmatprep.subr.mxu0 0.0
    %144 = vmatpush1.msra.mxu0 0.0
    %145 = vmatprep.subr.mxu0 0.0
    %146 = vmatpush1.msra.mxu0 0.0
    %147 = vmatprep.subr.mxu0 0.0
    %148 = vmatpush1.msra.mxu0 0.0
    %149 = vmatprep.subr.mxu0 0.0
    %150 = vmatpush1.msra.mxu0 0.0
    %151 = vmatprep.subr.mxu0 0.0
    %152 = vmatpush1.msra.mxu0 0.0
    %153 = vmatprep.subr.mxu0 0.0
    %154 = vmatpush1.msra.mxu0 0.0
    %155 = vmatprep.subr.mxu0 0.0
    %156 = vmatpush1.msra.mxu0 0.0
    %157 = vmatprep.subr.mxu0 0.0
    %158 = vmatpush1.msra.mxu0 0.0
    %159 = vmatprep.subr.mxu0 0.0
    %160 = vmatpush1.msra.mxu0 0.0
    %161 = vmatprep.subr.mxu0 0.0
    %162 = vmatpush1.msra.mxu0 0.0
    %163 = vmatprep.subr.mxu0 0.0
    %164 = vmatpush1.msra.mxu0 0.0
    %165 = vmatprep.subr.mxu0 0.0
    %166 = vmatpush1.msra.mxu0 0.0
    %167 = vmatprep.subr.mxu0 0.0
    %168 = vmatpush1.msra.mxu0 0.0
    %169 = vmatprep.subr.mxu0 0.0
    %170 = vmatpush1.msra.mxu0 0.0
    %171 = vmatprep.subr.mxu0 0.0
    %172 = vmatpush1.msra.mxu0 0.0
    %173 = vmatprep.subr.mxu0 0.0
    %174 = vmatpush1.msra.mxu0 0.0
    %175 = vmatprep.subr.mxu0 0.0
    %176 = vmatpush1.msra.mxu0 0.0
    %177 = vmatprep.subr.mxu0 0.0
    %178 = vmatpush1.msra.mxu0 0.0
    %179 = vmatprep.subr.mxu0 0.0
    %180 = vmatpush1.msra.mxu0 0.0
    %181 = vmatprep.subr.mxu0 0.0
    %182 = vmatpush1.msra.mxu0 0.0
    %183 = vmatprep.mubr.f32.mxu0 0.0
    %184 = vmatmul.mubr.f32.gmra.mrb[0].mxu0 %v114
    %v185 = vpop.f32.mrb[0].mxu0
    %v186 = vadd.f32 %v110, %v185
    %v187 = vpop.f32.mrb[0].mxu0
    %188 = vmatprep.mubr.f32.mxu0 0.0
    %189 = vmatmul.mubr.f32.gmra.mrb[0].mxu0 %v117
    %v190 = vpop.f32.mrb[0].mxu0
    %v191 = vadd.f32 %v110, %v190
    %v192 = vpop.f32.mrb[0].mxu0
    %193 = vdwg.mxu0
    %v194 = vxor.u32 %v186, 2147483648
    %v195 = vxor.u32 %v191, 2147483648
    %v196 = vmul.f32 %v194, 1.442695
    %v197 = vpow.pop %v196
    %v198 = vmul.f32 %v195, 1.442695
    %v199 = vpow.pop %v198
    %v200 = vadd.f32 %v197, 1.0
    %v201 = vadd.f32 %v199, 1.0
    %v202 = vrcp.pop %v200
    %v203 = vmul.f32 1.0, %v202
    %v204 = vrcp.pop %v201
    %v205 = vmul.f32 1.0, %v204
    %v206 = vmul.f32 %v186, %v203
    %v207 = vmul.f32 %v191, %v205
    %v208 = vld [vmem:[#allocation11] sm:$0xff]
    %v209 = vld [vmem:[#allocation11 + $0x8] sm:$0xff]
    %v210 = vld [vmem:[#allocation8] sm:$0xff]
    %v211 = vld [vmem:[#allocation8 + $0x8] sm:$0xff]
    %v212 = vld [vmem:[#allocation8 + $0x10] sm:$0xff]
    %v213 = vld [vmem:[#allocation8 + $0x18] sm:$0xff]
    %v214 = vld [vmem:[#allocation8 + $0x20] sm:$0xff]
    %v215 = vld [vmem:[#allocation8 + $0x28] sm:$0xff]
    %v216 = vld [vmem:[#allocation8 + $0x30] sm:$0xff]
    %v217 = vld [vmem:[#allocation8 + $0x38] sm:$0xff]
    %v218 = vld [vmem:[#allocation8 + $0x40] sm:$0xff]
    %v219 = vld [vmem:[#allocation8 + $0x48] sm:$0xff]
    %v220 = vld [vmem:[#allocation8 + $0x50] sm:$0xff]
    %v221 = vld [vmem:[#allocation8 + $0x58] sm:$0xff]
    %v222 = vld [vmem:[#allocation8 + $0x60] sm:$0xff]
    %v223 = vld [vmem:[#allocation8 + $0x68] sm:$0xff]
    %v224 = vld [vmem:[#allocation8 + $0x70] sm:$0xff]
    %v225 = vld [vmem:[#allocation8 + $0x78] sm:$0xff]
    %226 = vmatprep.subr.mxu0 0.0
    %227 = vmatpush1.msra.mxu0 %v210
    %228 = vmatprep.subr.mxu0 0.0
    %229 = vmatpush1.msra.mxu0 %v211
    %230 = vmatprep.subr.mxu0 0.0
    %231 = vmatpush1.msra.mxu0 %v212
    %232 = vmatprep.subr.mxu0 0.0
    %233 = vmatpush1.msra.mxu0 %v213
    %234 = vmatprep.subr.mxu0 0.0
    %235 = vmatpush1.msra.mxu0 %v214
    %236 = vmatprep.subr.mxu0 0.0
    %237 = vmatpush1.msra.mxu0 %v215
    %238 = vmatprep.subr.mxu0 0.0
    %239 = vmatpush1.msra.mxu0 %v216
    %240 = vmatprep.subr.mxu0 0.0
    %241 = vmatpush1.msra.mxu0 %v217
    %242 = vmatprep.subr.mxu0 0.0
    %243 = vmatpush1.msra.mxu0 %v218
    %244 = vmatprep.subr.mxu0 0.0
    %245 = vmatpush1.msra.mxu0 %v219
    %246 = vmatprep.subr.mxu0 0.0
    %247 = vmatpush1.msra.mxu0 %v220
    %248 = vmatprep.subr.mxu0 0.0
    %249 = vmatpush1.msra.mxu0 %v221
    %250 = vmatprep.subr.mxu0 0.0
    %251 = vmatpush1.msra.mxu0 %v222
    %252 = vmatprep.subr.mxu0 0.0
    %253 = vmatpush1.msra.mxu0 %v223
    %254 = vmatprep.subr.mxu0 0.0
    %255 = vmatpush1.msra.mxu0 %v224
    %256 = vmatprep.subr.mxu0 0.0
    %257 = vmatpush1.msra.mxu0 %v225
    %258 = vmatprep.subr.mxu0 0.0
    %259 = vmatpush1.msra.mxu0 0.0
    %260 = vmatprep.subr.mxu0 0.0
    %261 = vmatpush1.msra.mxu0 0.0
    %262 = vmatprep.subr.mxu0 0.0
    %263 = vmatpush1.msra.mxu0 0.0
    %264 = vmatprep.subr.mxu0 0.0
    %265 = vmatpush1.msra.mxu0 0.0
    %266 = vmatprep.subr.mxu0 0.0
    %267 = vmatpush1.msra.mxu0 0.0
    %268 = vmatprep.subr.mxu0 0.0
    %269 = vmatpush1.msra.mxu0 0.0
    %270 = vmatprep.subr.mxu0 0.0
    %271 = vmatpush1.msra.mxu0 0.0
    %272 = vmatprep.subr.mxu0 0.0
    %273 = vmatpush1.msra.mxu0 0.0
    %274 = vmatprep.subr.mxu0 0.0
    %275 = vmatpush1.msra.mxu0 0.0
    %276 = vmatprep.subr.mxu0 0.0
    %277 = vmatpush1.msra.mxu0 0.0
    %278 = vmatprep.subr.mxu0 0.0
    %279 = vmatpush1.msra.mxu0 0.0
    %280 = vmatprep.subr.mxu0 0.0
    %281 = vmatpush1.msra.mxu0 0.0
    %282 = vmatprep.subr.mxu0 0.0
    %283 = vmatpush1.msra.mxu0 0.0
    %284 = vmatprep.subr.mxu0 0.0
    %285 = vmatpush1.msra.mxu0 0.0
    %286 = vmatprep.subr.mxu0 0.0
    %287 = vmatpush1.msra.mxu0 0.0
    %288 = vmatprep.subr.mxu0 0.0
    %289 = vmatpush1.msra.mxu0 0.0
    %290 = vmatprep.mubr.f32.mxu0 0.0
    %291 = vmatmul.mubr.f32.gmra.mrb[0].mxu0 %v206
    %v292 = vpop.f32.mrb[0].mxu0
    %v293 = vadd.f32 0.0, %v292
    %v294 = vpop.f32.mrb[0].mxu0
    %295 = vmatprep.mubr.f32.mxu0 0.0
    %296 = vmatmul.mubr.f32.gmra.mrb[0].mxu0 %v207
    %v297 = vpop.f32.mrb[0].mxu0
    %v298 = vadd.f32 0.0, %v297
    %v299 = vpop.f32.mrb[0].mxu0
    %300 = vdwg.mxu0
    %v301 = vadd.f32 %v208, %v293
    %v302 = vadd.f32 %v209, %v298
    %303 = vst.msk [vmem:[#allocation11] sm:$0xff] %vm112, %v301
    %304 = vst.msk [vmem:[#allocation11 + $0x8] sm:$0xff] %vm112, %v302
    // Predicated region
    $region46: #{tpu_custom_call.1} parent=1 // pred_check
      _
    $region47: #{tpu_custom_call.1} parent=1 // pred_check_branch
      %306 = sbr.rel (0) target = $region49
    $region48: #{tpu_custom_call.1} parent=1 // pred_region
      %s308 = ssub.s32 256, 256
      %309 = vsyncadd [#allocation4], %s308
      %s310 = sshll.u32 [#allocation11], 4
      %s311 = int_to_ptr.vmem [resolvable:$true] %s310
      %316 = dma.vmem_to_hbm [thread:$0]  %s311, 256, %s5, [#allocation4], 128, 128, 8
    $region49: #{tpu_custom_call.1} parent=1 // pred_fallthru
      _
    // Predicated region
    $region50: #{tpu_custom_call.1} parent=1 // pred_check
      _
    $region51: #{tpu_custom_call.1} parent=1 // pred_check_branch
      %318 = sbr.rel (0) target = $region53
    $region52: #{tpu_custom_call.1} parent=1 // pred_region
      %319 = dma.done [#allocation4], 256
    $region53: #{tpu_custom_call.1} parent=1 // pred_fallthru
      _
    %320 = vsyncpa [#allocation3], 1
    %321 = vsyncpa [#allocation6], 1
    %322 = vsyncpa [#allocation9], 1
    %323 = vsyncpa [#allocation4], 1

</llo_original>
